<compile_context>
chip_gen: v7x
topology: tpu7x:2x2x1
jax: 0.10.0
libtpu: 0.0.40
codegen_flags: <defaults>
</compile_context>

<pallas_src>
import functools

import jax
import jax.numpy as jnp
import numpy as np
from jax import lax
from jax.experimental import pallas as pl
from jax.experimental.pallas import tpu as pltpu

_INV_SQRT2 = 0.7071067811865476
_LN_EPS = 1e-5          # nn.LayerNorm default
_OUT_LANES = 128        # lane-dense output slab width (one full vreg lane span)


def _gelu_exact(x):
    # PyTorch nn.GELU() default is the exact (erf-based) GELU.
    return 0.5 * x * (1.0 + lax.erf(x * _INV_SQRT2))


def _round_up(x, m):
    return ((x + m - 1) // m) * m


def _mentor_kernel(
    # inputs (5 refs)
    state_ref,      # (Bblk, S)
    w_state_ref,    # (S, 128)   [ w1 | wc1_s | 0-pad ]
    w_main_ref,     # (H, 128)   [ w2 | w2@wp | w2@wv | w2@wv | 0-pad ]  (lane-shifted)
    w_causal_ref,   # (H, 128)   [ 0 ... | wc2/A | 0-pad ]               (lane-shifted)
    vec_ref,        # (8, 128)   packed row vectors (see wrapper)
    # output
    out_ref,        # (Bblk, 128) [ feat | pol | val | conf | causal | 0-pad ]
    *,
    state_dim: int,
    hidden_dim: int,
    num_actions: int,
):
    S, H, A = state_dim, hidden_dim, num_actions

    x = state_ref[...]                          # (B, S) f32

    # packed row-vector slab (static slices -> free views)
    b_state  = vec_ref[0:1, :]                  # (1,128) [ b1 | bc1 | 0 ]
    wc1_a    = vec_ref[1:2, :H]                 # (1,H)   action column of causal_network[0]
    bias_row = vec_ref[2:3, :]                  # (1,128) packed output bias at final lanes
    ln_g     = vec_ref[3:4, :H]
    ln_b     = vec_ref[4:5, :H]

    # ---- fused state-side matmul (feature_projector[0] + causal_network[0]) --
    r = jnp.dot(x, w_state_ref[...], preferred_element_type=jnp.float32) + b_state
    h = r[:, :H]                                # feature-projector pre-activation
    base = r[:, H:2 * H]                        # causal-network pre-activation (state part)

    # ---- LayerNorm + GELU ----------------------------------------------------
    mu = jnp.mean(h, axis=-1, keepdims=True)
    var = jnp.mean((h - mu) * (h - mu), axis=-1, keepdims=True)
    hn = (h - mu) * lax.rsqrt(var + _LN_EPS) * ln_g + ln_b
    g = _gelu_exact(hn)                         # (B, H)

    # ---- causal network GELU sum over actions (wc2 hoisted by linearity) -----
    acc_g = _gelu_exact(base)                   # action 0
    for a in range(1, A):                       # static, small (VPU/EUP only)
        acc_g = acc_g + _gelu_exact(base + float(a) * wc1_a)

    # ---- two lane-shifted matmuls + packed bias -> full 128-lane slab --------
    slab = (jnp.dot(g, w_main_ref[...], preferred_element_type=jnp.float32)
            + jnp.dot(acc_g, w_causal_ref[...], preferred_element_type=jnp.float32)
            + bias_row)

    # confidence lane = sigmoid(value) (value duplicated at lane H+A+1)
    lanes = lax.broadcasted_iota(jnp.int32, slab.shape, 1)
    slab = jnp.where(lanes == H + A + 1, jax.nn.sigmoid(slab), slab)

    out_ref[...] = slab                         # single unmasked 128-lane store


def llm_mentor_forward(state, params, num_actions):
    B, S = state.shape
    H = params["w1"].shape[1]
    A = num_actions
    assert A >= 1, "num_actions must be >= 1"
    used = H + A + 2 + S
    assert used <= _OUT_LANES, "output slab too narrow for these dims"
    assert 2 * H <= _OUT_LANES, "fused state-side weight needs 2*H <= 128"
    f32 = jnp.float32

    # ---- batch padding / grid -------------------------------------------------
    if B <= 128:
        block_b = max(8, _round_up(B, 8))
        B_pad = block_b
    else:
        block_b = 128
        B_pad = _round_up(B, 128)
    n_blocks = B_pad // block_b
    x = jnp.pad(state.astype(f32), ((0, B_pad - B), (0, 0)))

    # ---- wrapper-side weight fusion / lane-shift packing (tiny, once/call) ----
    off_pol, off_val, off_conf, off_causal = H, H + A, H + A + 1, H + A + 2

    w2, b2 = params["w2"], params["b2"]
    wp, bp = params["wp"], params["bp"]
    wv, bv = params["wv"], params["bv"]

    # state-side: x @ [w1 | wc1_s]
    w_state = jnp.zeros((S, _OUT_LANES), f32)
    w_state = (w_state.at[:, :H].set(params["w1"])
                       .at[:, H:2 * H].set(params["wc1_s"]))
    b_state = jnp.zeros((1, _OUT_LANES), f32)
    b_state = (b_state.at[:, :H].set(params["b1"])
                       .at[:, H:2 * H].set(params["bc1"]))

    # main: gelu(hn) @ [w2 | w2@wp | w2@wv | w2@wv] at final lane offsets
    w_main = jnp.zeros((H, _OUT_LANES), f32)
    w_main = (w_main.at[:, :H].set(w2)
                     .at[:, off_pol:off_pol + A].set(w2 @ wp)
                     .at[:, off_val:off_val + 1].set(w2 @ wv)
                     .at[:, off_conf:off_conf + 1].set(w2 @ wv))

    # causal: acc_g @ (wc2 / A), column-shifted to its output lanes
    w_causal = jnp.zeros((H, _OUT_LANES), f32)
    w_causal = w_causal.at[:, off_causal:off_causal + S].set(
        params["wc2"] * (1.0 / float(A)))

    # packed output bias row (feat / heads / dup-value / causal)
    head_p = b2 @ wp + bp                       # (1, A)
    head_v = b2 @ wv + bv                       # (1, 1)
    bias_row = jnp.zeros((1, _OUT_LANES), f32)
    bias_row = (bias_row.at[:, :H].set(b2)
                         .at[:, off_pol:off_pol + A].set(head_p)
                         .at[:, off_val:off_val + 1].set(head_v)
                         .at[:, off_conf:off_conf + 1].set(head_v)
                         .at[:, off_causal:off_causal + S].set(params["bc2"]))

    # row-vector slab
    vec = jnp.zeros((8, _OUT_LANES), f32)
    vec = (vec.at[0:1, :].set(b_state)
              .at[1:2, :H].set(params["wc1_a"])
              .at[2:3, :].set(bias_row)
              .at[3:4, :H].set(params["ln_g"])
              .at[4:5, :H].set(params["ln_b"]))

    kernel = functools.partial(_mentor_kernel, state_dim=S, hidden_dim=H,
                               num_actions=A)

    slab = pl.pallas_call(
        kernel,
        out_shape=jax.ShapeDtypeStruct((B_pad, _OUT_LANES), jnp.float32),
        grid=(n_blocks,),
        in_specs=[
            pl.BlockSpec((block_b, S), lambda i: (i, 0)),
            pl.BlockSpec((S, _OUT_LANES), lambda i: (0, 0)),
            pl.BlockSpec((H, _OUT_LANES), lambda i: (0, 0)),
            pl.BlockSpec((H, _OUT_LANES), lambda i: (0, 0)),
            pl.BlockSpec((8, _OUT_LANES), lambda i: (0, 0)),
        ],
        out_specs=pl.BlockSpec((block_b, _OUT_LANES), lambda i: (i, 0)),
        compiler_params=pltpu.CompilerParams(
            dimension_semantics=("parallel",)),
    )(x, w_state, w_main, w_causal, vec)

    # ---- split lane-dense slab (drop batch padding) ----------------------------
    slab = slab[:B]
    feats  = slab[:, :H]
    pol    = slab[:, off_pol:off_pol + A]
    val    = slab[:, off_val:off_val + 1]
    conf   = slab[:, off_conf:off_conf + 1]
    causal = slab[:, off_causal:off_causal + S]

    # glue: planning_logits = policy_logits.unsqueeze(1).repeat(1, 5, 1)
    planning_logits = jnp.repeat(pol[:, None, :], 5, axis=1)

    return {
        "policy_logits": pol,
        "value": val,
        "features": feats,
        "causal_features": causal,
        "confidence": conf,
        "planning_logits": planning_logits,
    }


# ------------------------- reference (plain JAX) ----------------------------
def _reference_forward(state, params, num_actions):
    def gelu(x):
        return 0.5 * x * (1.0 + lax.erf(x * _INV_SQRT2))

    h = state @ params["w1"] + params["b1"]
    mu = jnp.mean(h, axis=-1, keepdims=True)
    var = jnp.mean((h - mu) ** 2, axis=-1, keepdims=True)
    hn = (h - mu) / jnp.sqrt(var + _LN_EPS) * params["ln_g"] + params["ln_b"]
    feat = gelu(hn) @ params["w2"] + params["b2"]
    pol = feat @ params["wp"] + params["bp"]
    val = feat @ params["wv"] + params["bv"]
    base = state @ params["wc1_s"] + params["bc1"]
    outs = []
    for a in range(num_actions):
        cg = gelu(base + float(a) * params["wc1_a"])
        outs.append(cg @ params["wc2"] + params["bc2"])
    causal = jnp.mean(jnp.stack(outs, axis=1), axis=1)
    return pol, val, feat, causal


# ------------------------------ parameter init -------------------------------
def _init_params(key, state_dim, hidden_dim, num_actions):
    # Deterministic init mimicking nn.Linear default: U(-1/sqrt(fan_in), +1/sqrt(fan_in)).
    def linear(k, fan_in, fan_out):
        kw, kb = jax.random.split(k)
        bound = 1.0 / np.sqrt(fan_in)
        w = jax.random.uniform(kw, (fan_in, fan_out), jnp.float32, -bound, bound)
        b = jax.random.uniform(kb, (1, fan_out), jnp.float32, -bound, bound)
        return w, b

    k1, k2, k3, k4, k5, k6 = jax.random.split(key, 6)
    w1, b1 = linear(k1, state_dim, hidden_dim)
    w2, b2 = linear(k2, hidden_dim, hidden_dim)
    wp, bp = linear(k3, hidden_dim, num_actions)
    wv, bv = linear(k4, hidden_dim, 1)
    wc1, bc1 = linear(k5, state_dim + 1, hidden_dim)
    wc2, bc2 = linear(k6, hidden_dim, state_dim)
    return {
        "w1": w1, "b1": b1,
        "ln_g": jnp.ones((1, hidden_dim), jnp.float32),
        "ln_b": jnp.zeros((1, hidden_dim), jnp.float32),
        "w2": w2, "b2": b2,
        "wp": wp, "bp": bp,
        "wv": wv, "bv": bv,
        "wc1_s": wc1[:state_dim, :], "wc1_a": wc1[state_dim:, :], "bc1": bc1,
        "wc2": wc2, "bc2": bc2,
    }


if __name__ == "__main__":
    STATE_DIM = 4      # CartPole-v1 state
    NUM_ACTIONS = 2
    HIDDEN_DIM = 32    # MENTOR_CONFIG['hidden_dim']
    BATCH = 2

    key = jax.random.PRNGKey(0)
    k_x, k_p = jax.random.split(key)
    state = jax.random.normal(k_x, (BATCH, STATE_DIM), jnp.float32)
    params = _init_params(k_p, STATE_DIM, HIDDEN_DIM, NUM_ACTIONS)

    out = llm_mentor_forward(state, params, NUM_ACTIONS)
    jax.block_until_ready(out)

    # sanity check against plain-JAX reference
    ref_pol, ref_val, ref_feat, ref_causal = _reference_forward(state, params, NUM_ACTIONS)
    np.testing.assert_allclose(np.asarray(out["policy_logits"]), np.asarray(ref_pol), atol=1e-4, rtol=1e-4)
    np.testing.assert_allclose(np.asarray(out["value"]), np.asarray(ref_val), atol=1e-4, rtol=1e-4)
    np.testing.assert_allclose(np.asarray(out["features"]), np.asarray(ref_feat), atol=1e-4, rtol=1e-4)
    np.testing.assert_allclose(np.asarray(out["causal_features"]), np.asarray(ref_causal), atol=1e-4, rtol=1e-4)
    np.testing.assert_allclose(np.asarray(out["confidence"]),
                               1.0 / (1.0 + np.exp(-np.asarray(ref_val))), atol=1e-4, rtol=1e-4)
    assert out["planning_logits"].shape == (BATCH, 5, NUM_ACTIONS)

    print("KERNEL_OK")
</pallas_src>

<mosaic_0001>
module attributes {stable_mosaic.version = 11 : i64} {
  func.func @_mentor_kernel(%arg0: i32, %arg1: memref<8x4xf32, #tpu.memory_space<vmem>>, %arg2: memref<4x128xf32, #tpu.memory_space<vmem>>, %arg3: memref<32x128xf32, #tpu.memory_space<vmem>>, %arg4: memref<32x128xf32, #tpu.memory_space<vmem>>, %arg5: memref<8x128xf32, #tpu.memory_space<vmem>>, %arg6: memref<8x128xf32, #tpu.memory_space<vmem>>) attributes {dimension_semantics = [#tpu.dimension_semantics<parallel>], iteration_bounds = array<i64: 1>, scalar_prefetch = 0 : i64, scratch_operands = 0 : i64, tpu.core_type = #tpu.core_type<tc>, window_params = [{transform_indices = @transform_0, window_bounds = array<i64: 8, 4>}, {pipeline_mode = #tpu.pipeline_mode<synchronous>, transform_indices = @transform_1, window_bounds = array<i64: 4, 128>}, {pipeline_mode = #tpu.pipeline_mode<synchronous>, transform_indices = @transform_2, window_bounds = array<i64: 32, 128>}, {pipeline_mode = #tpu.pipeline_mode<synchronous>, transform_indices = @transform_3, window_bounds = array<i64: 32, 128>}, {pipeline_mode = #tpu.pipeline_mode<synchronous>, transform_indices = @transform_4, window_bounds = array<i64: 8, 128>}, {transform_indices = @transform_5, window_bounds = array<i64: 8, 128>}]} {
    %c0 = arith.constant 0 : index
    %c0_0 = arith.constant 0 : index
    %0 = vector.load %arg1[%c0, %c0_0] : memref<8x4xf32, #tpu.memory_space<vmem>>, vector<8x4xf32>
    %c0_1 = arith.constant 0 : index
    %c0_2 = arith.constant 0 : index
    %1 = vector.load %arg5[%c0_1, %c0_2] : memref<8x128xf32, #tpu.memory_space<vmem>>, vector<1x128xf32>
    %c1 = arith.constant 1 : index
    %c0_3 = arith.constant 0 : index
    %2 = vector.load %arg5[%c1, %c0_3] : memref<8x128xf32, #tpu.memory_space<vmem>>, vector<1x32xf32>
    %c2 = arith.constant 2 : index
    %c0_4 = arith.constant 0 : index
    %3 = vector.load %arg5[%c2, %c0_4] : memref<8x128xf32, #tpu.memory_space<vmem>>, vector<1x128xf32>
    %c3 = arith.constant 3 : index
    %c0_5 = arith.constant 0 : index
    %4 = vector.load %arg5[%c3, %c0_5] : memref<8x128xf32, #tpu.memory_space<vmem>>, vector<1x32xf32>
    %c4 = arith.constant 4 : index
    %c0_6 = arith.constant 0 : index
    %5 = vector.load %arg5[%c4, %c0_6] : memref<8x128xf32, #tpu.memory_space<vmem>>, vector<1x32xf32>
    %c0_7 = arith.constant 0 : index
    %c0_8 = arith.constant 0 : index
    %6 = vector.load %arg2[%c0_7, %c0_8] : memref<4x128xf32, #tpu.memory_space<vmem>>, vector<4x128xf32>
    %cst = arith.constant dense<0.000000e+00> : vector<8x128xf32>
    %7 = tpu.matmul %0, %6, %cst {dimension_numbers = #tpu.dot_dimension_numbers<[1], [0], [0], [1], [0, 0, 1, 1], [], []>} : vector<8x4xf32>, vector<4x128xf32>, vector<8x128xf32> -> vector<8x128xf32>
    %8 = vector.broadcast %1 : vector<1x128xf32> to vector<8x128xf32>
    %9 = arith.addf %7, %8 : vector<8x128xf32>
    %10 = vector.extract_strided_slice %9 {offsets = [0, 0], sizes = [8, 32], strides = [1, 1]} : vector<8x128xf32> to vector<8x32xf32>
    %11 = vector.extract_strided_slice %9 {offsets = [0, 32], sizes = [8, 32], strides = [1, 1]} : vector<8x128xf32> to vector<8x32xf32>
    %cst_9 = arith.constant dense<0.000000e+00> : vector<8xf32>
    %12 = vector.multi_reduction <add>, %10, %cst_9 [1] : vector<8x32xf32> to vector<8xf32>
    %13 = vector.shape_cast %12 : vector<8xf32> to vector<8x1xf32>
    %cst_10 = arith.constant 3.200000e+01 : f32
    %14 = vector.broadcast %cst_10 : f32 to vector<8x1xf32>
    %15 = arith.divf %13, %14 : vector<8x1xf32>
    %16 = vector.broadcast %15 : vector<8x1xf32> to vector<8x32xf32>
    %17 = arith.subf %10, %16 : vector<8x32xf32>
    %18 = vector.broadcast %15 : vector<8x1xf32> to vector<8x32xf32>
    %19 = arith.subf %10, %18 : vector<8x32xf32>
    %20 = arith.mulf %17, %19 : vector<8x32xf32>
    %cst_11 = arith.constant dense<0.000000e+00> : vector<8xf32>
    %21 = vector.multi_reduction <add>, %20, %cst_11 [1] : vector<8x32xf32> to vector<8xf32>
    %22 = vector.shape_cast %21 : vector<8xf32> to vector<8x1xf32>
    %cst_12 = arith.constant 3.200000e+01 : f32
    %23 = vector.broadcast %cst_12 : f32 to vector<8x1xf32>
    %24 = arith.divf %22, %23 : vector<8x1xf32>
    %25 = vector.broadcast %15 : vector<8x1xf32> to vector<8x32xf32>
    %26 = arith.subf %10, %25 : vector<8x32xf32>
    %cst_13 = arith.constant 9.99999974E-6 : f32
    %27 = vector.broadcast %cst_13 : f32 to vector<8x1xf32>
    %28 = arith.addf %24, %27 : vector<8x1xf32>
    %29 = math.rsqrt %28 : vector<8x1xf32>
    %30 = vector.broadcast %29 : vector<8x1xf32> to vector<8x32xf32>
    %31 = arith.mulf %26, %30 : vector<8x32xf32>
    %32 = vector.broadcast %4 : vector<1x32xf32> to vector<8x32xf32>
    %33 = arith.mulf %31, %32 : vector<8x32xf32>
    %34 = vector.broadcast %5 : vector<1x32xf32> to vector<8x32xf32>
    %35 = arith.addf %33, %34 : vector<8x32xf32>
    %cst_14 = arith.constant 5.000000e-01 : f32
    %36 = vector.broadcast %cst_14 : f32 to vector<8x32xf32>
    %37 = arith.mulf %36, %35 : vector<8x32xf32>
    %cst_15 = arith.constant 0.707106769 : f32
    %38 = vector.broadcast %cst_15 : f32 to vector<8x32xf32>
    %39 = arith.mulf %35, %38 : vector<8x32xf32>
    %40 = math.erf %39 : vector<8x32xf32>
    %cst_16 = arith.constant 1.000000e+00 : f32
    %41 = vector.broadcast %cst_16 : f32 to vector<8x32xf32>
    %42 = arith.addf %41, %40 : vector<8x32xf32>
    %43 = arith.mulf %37, %42 : vector<8x32xf32>
    %cst_17 = arith.constant 5.000000e-01 : f32
    %44 = vector.broadcast %cst_17 : f32 to vector<8x32xf32>
    %45 = arith.mulf %44, %11 : vector<8x32xf32>
    %cst_18 = arith.constant 0.707106769 : f32
    %46 = vector.broadcast %cst_18 : f32 to vector<8x32xf32>
    %47 = arith.mulf %11, %46 : vector<8x32xf32>
    %48 = math.erf %47 : vector<8x32xf32>
    %cst_19 = arith.constant 1.000000e+00 : f32
    %49 = vector.broadcast %cst_19 : f32 to vector<8x32xf32>
    %50 = arith.addf %49, %48 : vector<8x32xf32>
    %51 = arith.mulf %45, %50 : vector<8x32xf32>
    %cst_20 = arith.constant 1.000000e+00 : f32
    %52 = vector.broadcast %cst_20 : f32 to vector<1x32xf32>
    %53 = arith.mulf %52, %2 : vector<1x32xf32>
    %54 = vector.broadcast %53 : vector<1x32xf32> to vector<8x32xf32>
    %55 = arith.addf %11, %54 : vector<8x32xf32>
    %cst_21 = arith.constant 5.000000e-01 : f32
    %56 = vector.broadcast %cst_21 : f32 to vector<8x32xf32>
    %57 = arith.mulf %56, %55 : vector<8x32xf32>
    %cst_22 = arith.constant 0.707106769 : f32
    %58 = vector.broadcast %cst_22 : f32 to vector<8x32xf32>
    %59 = arith.mulf %55, %58 : vector<8x32xf32>
    %60 = math.erf %59 : vector<8x32xf32>
    %cst_23 = arith.constant 1.000000e+00 : f32
    %61 = vector.broadcast %cst_23 : f32 to vector<8x32xf32>
    %62 = arith.addf %61, %60 : vector<8x32xf32>
    %63 = arith.mulf %57, %62 : vector<8x32xf32>
    %64 = arith.addf %51, %63 : vector<8x32xf32>
    %c0_24 = arith.constant 0 : index
    %c0_25 = arith.constant 0 : index
    %65 = vector.load %arg3[%c0_24, %c0_25] : memref<32x128xf32, #tpu.memory_space<vmem>>, vector<32x128xf32>
    %cst_26 = arith.constant dense<0.000000e+00> : vector<8x128xf32>
    %66 = tpu.matmul %43, %65, %cst_26 {dimension_numbers = #tpu.dot_dimension_numbers<[1], [0], [0], [1], [0, 0, 1, 1], [], []>} : vector<8x32xf32>, vector<32x128xf32>, vector<8x128xf32> -> vector<8x128xf32>
    %c0_27 = arith.constant 0 : index
    %c0_28 = arith.constant 0 : index
    %67 = vector.load %arg4[%c0_27, %c0_28] : memref<32x128xf32, #tpu.memory_space<vmem>>, vector<32x128xf32>
    %cst_29 = arith.constant dense<0.000000e+00> : vector<8x128xf32>
    %68 = tpu.matmul %64, %67, %cst_29 {dimension_numbers = #tpu.dot_dimension_numbers<[1], [0], [0], [1], [0, 0, 1, 1], [], []>} : vector<8x32xf32>, vector<32x128xf32>, vector<8x128xf32> -> vector<8x128xf32>
    %69 = arith.addf %66, %68 : vector<8x128xf32>
    %70 = vector.broadcast %3 : vector<1x128xf32> to vector<8x128xf32>
    %71 = arith.addf %69, %70 : vector<8x128xf32>
    %72 = tpu.iota {dimensions = array<i32: 1>} : vector<8x128xi32>
    %c35_i32 = arith.constant 35 : i32
    %73 = vector.broadcast %c35_i32 : i32 to vector<8x128xi32>
    %74 = arith.cmpi eq, %72, %73 : vector<8x128xi32>
    %75 = arith.negf %71 : vector<8x128xf32>
    %76 = math.exp %75 : vector<8x128xf32>
    %cst_30 = arith.constant 1.000000e+00 : f32
    %77 = vector.broadcast %cst_30 : f32 to vector<8x128xf32>
    %78 = arith.addf %77, %76 : vector<8x128xf32>
    %79 = arith.divf %77, %78 : vector<8x128xf32>
    %80 = arith.select %74, %79, %71 : vector<8x128xi1>, vector<8x128xf32>
    %c0_31 = arith.constant 0 : index
    %c0_32 = arith.constant 0 : index
    %81 = vector.load %arg6[%c0_31, %c0_32] : memref<8x128xf32, #tpu.memory_space<vmem>>, vector<8x128xf32>
    tpu.vector_store %arg6[%c0_31, %c0_32], %80 {strides = array<i32>} : memref<8x128xf32, #tpu.memory_space<vmem>>, vector<8x128xf32>,
    return
  }
  func.func @transform_0(%arg0: i32) -> (i32, i32) {
    %c0_i32 = arith.constant 0 : i32
    %c0_i32_0 = arith.constant 0 : i32
    return %arg0, %c0_i32 : i32, i32
  }
  func.func @transform_1(%arg0: i32) -> (i32, i32) {
    %c0_i32 = arith.constant 0 : i32
    %c0_i32_0 = arith.constant 0 : i32
    %c0_i32_1 = arith.constant 0 : i32
    return %c0_i32, %c0_i32_0 : i32, i32
  }
  func.func @transform_2(%arg0: i32) -> (i32, i32) {
    %c0_i32 = arith.constant 0 : i32
    %c0_i32_0 = arith.constant 0 : i32
    %c0_i32_1 = arith.constant 0 : i32
    return %c0_i32, %c0_i32_0 : i32, i32
  }
  func.func @transform_3(%arg0: i32) -> (i32, i32) {
    %c0_i32 = arith.constant 0 : i32
    %c0_i32_0 = arith.constant 0 : i32
    %c0_i32_1 = arith.constant 0 : i32
    return %c0_i32, %c0_i32_0 : i32, i32
  }
  func.func @transform_4(%arg0: i32) -> (i32, i32) {
    %c0_i32 = arith.constant 0 : i32
    %c0_i32_0 = arith.constant 0 : i32
    %c0_i32_1 = arith.constant 0 : i32
    return %c0_i32, %c0_i32_0 : i32, i32
  }
  func.func @transform_5(%arg0: i32) -> (i32, i32) {
    %c0_i32 = arith.constant 0 : i32
    %c0_i32_0 = arith.constant 0 : i32
    return %arg0, %c0_i32 : i32, i32
  }
}

</mosaic_0001>

<llo_original>
// kernel: tpu_custom_call.1
$region0: #{tpu_custom_call.1}
  #allocation0 [shape = 'u32[]', space=smem, size = 0x4, offset = 0x4, fixed_abs, tag = 'smem constant byte address 0x4 - core index']
  #allocation1 [shape = 'u32[144,128]{1,0:T(1,128)}', space=vmem, size = 0x12000, scoped, tag = 'internal scratch']
  %s0 = inlined_call_operand.vmem [shape: f32[8,4], index: 0, kind: input, shape index: {}]
  %s1 = inlined_call_operand.vmem [shape: f32[4,128], index: 1, kind: input, shape index: {}]
  %s2 = inlined_call_operand.hbm [shape: f32[32,128], index: 2, kind: input, shape index: {}]
  %s3 = inlined_call_operand.hbm [shape: f32[32,128], index: 3, kind: input, shape index: {}]
  %s4 = inlined_call_operand.vmem [shape: f32[8,128], index: 4, kind: input, shape index: {}]
  %s5 = inlined_call_operand.hbm [shape: f32[8,128], index: 5, kind: output, shape index: {}]
  %s6 = sld [smem:[#allocation0]]
  $region38: #{tpu_custom_call.1} parent=0
    _
  %s8 = ssub.s32 1, %s6
  %s9 = scalar_select 0, %s8, %s6
  $region1: #{tpu_custom_call.1} parent=0
    #allocation2 [shape = 'u8[16384]{0}', space=vmem, size = 0x4000, scoped, tag = 'input window, operand 2, single buffered']
    #allocation3 [shape = 's32[1]{0}', space=sflag, size = 0x4, scoped, tag = 'scoped memory for tpu_custom_call.1']
    #allocation4 [shape = 's32[1]{0}', space=sflag, size = 0x4, scoped, tag = 'scoped memory for tpu_custom_call.1']
    #allocation5 [shape = 'u8[16384]{0}', space=vmem, size = 0x4000, scoped, tag = 'input window, operand 3, single buffered']
    #allocation6 [shape = 's32[1]{0}', space=sflag, size = 0x4, scoped, tag = 'scoped memory for tpu_custom_call.1']
    #allocation7 [shape = 'u8[4096]{0}', space=vmem, size = 0x1000, scoped, tag = 'output window, operand 0, single buffered']
    %10 = vsyncpa [#allocation3], 0
    %11 = vsyncpa [#allocation6], 0
    %12 = vsyncpa [#allocation4], 0
    // Predicated region
    $region2: #{tpu_custom_call.1} parent=1 // pred_check
      _
    $region3: #{tpu_custom_call.1} parent=1 // pred_check_branch
      %14 = sbr.rel (0) target = $region5
    $region4: #{tpu_custom_call.1} parent=1 // pred_region
      _
    $region5: #{tpu_custom_call.1} parent=1 // pred_fallthru
      _
    // Predicated region
    $region6: #{tpu_custom_call.1} parent=1 // pred_check
      _
    $region7: #{tpu_custom_call.1} parent=1 // pred_check_branch
      %16 = sbr.rel (0) target = $region9
    $region8: #{tpu_custom_call.1} parent=1 // pred_region
      _
    $region9: #{tpu_custom_call.1} parent=1 // pred_fallthru
      _
    // Predicated region
    $region10: #{tpu_custom_call.1} parent=1 // pred_check
      _
    $region11: #{tpu_custom_call.1} parent=1 // pred_check_branch
      %18 = sbr.rel (0) target = $region13
    $region12: #{tpu_custom_call.1} parent=1 // pred_region
      %s20 = ssub.s32 512, 512
      %21 = vsyncadd [#allocation3], %s20
      %s22 = sshll.u32 [#allocation2], 4
      %s23 = int_to_ptr.vmem [resolvable:$true] %s22
      %28 = dma.hbm_to_vmem [thread:$0]  %s2, 512, %s23, [#allocation3], 128, 128, 8
    $region13: #{tpu_custom_call.1} parent=1 // pred_fallthru
      _
    // Predicated region
    $region14: #{tpu_custom_call.1} parent=1 // pred_check
      _
    $region15: #{tpu_custom_call.1} parent=1 // pred_check_branch
      %30 = sbr.rel (0) target = $region17
    $region16: #{tpu_custom_call.1} parent=1 // pred_region
      %s32 = ssub.s32 512, 512
      %33 = vsyncadd [#allocation6], %s32
      %s34 = sshll.u32 [#allocation5], 4
      %s35 = int_to_ptr.vmem [resolvable:$true] %s34
      %40 = dma.hbm_to_vmem [thread:$0]  %s3, 512, %s35, [#allocation6], 128, 128, 8
    $region17: #{tpu_custom_call.1} parent=1 // pred_fallthru
      _
    // Predicated region
    $region18: #{tpu_custom_call.1} parent=1 // pred_check
      _
    $region19: #{tpu_custom_call.1} parent=1 // pred_check_branch
      %42 = sbr.rel (0) target = $region21
    $region20: #{tpu_custom_call.1} parent=1 // pred_region
      _
    $region21: #{tpu_custom_call.1} parent=1 // pred_fallthru
      _
    // Predicated region
    $region22: #{tpu_custom_call.1} parent=1 // pred_check
      _
    $region23: #{tpu_custom_call.1} parent=1 // pred_check_branch
      %44 = sbr.rel (0) target = $region25
    $region24: #{tpu_custom_call.1} parent=1 // pred_region
      %45 = dma.done [#allocation3], 512
    $region25: #{tpu_custom_call.1} parent=1 // pred_fallthru
      _
    // Predicated region
    $region26: #{tpu_custom_call.1} parent=1 // pred_check
      _
    $region27: #{tpu_custom_call.1} parent=1 // pred_check_branch
      %47 = sbr.rel (0) target = $region29
    $region28: #{tpu_custom_call.1} parent=1 // pred_region
      %48 = dma.done [#allocation6], 512
    $region29: #{tpu_custom_call.1} parent=1 // pred_fallthru
      _
    %v49 = vld [vmem:[%s0] sm:$0xff]
    %v50 = vld [vmem:[%s4] sm:$0x1]
    %v51 = vld [vmem:[%s4 + $0x1] sm:$0x1]
    %v52 = vld [vmem:[%s4 + $0x2] sm:$0x1]
    %v53 = vld [vmem:[%s4 + $0x3] sm:$0x1]
    %v54 = vld [vmem:[%s4 + $0x4] sm:$0x1]
    %v55 = vld [vmem:[%s1] sm:$0xf]
    %v56 = vlaneseq
    %v57 = vshrl.u32 %v56, 7
    %v58 = vsub.s32 0, %v57
    %v59 = vrot.slane %v50, %v58
    %vm60 = vcmask 31744
    %v62 = vsel %vm60, %v49, 0
    %vm64 = vcmask 1043456
    %v66 = vsel %vm64, %v55, 0
    %68 = vmatprep.subr.mxu0 0.0
    %69 = vmatpush1.msra.mxu0 %v66
    %70 = vmatprep.subr.mxu0 0.0
    %71 = vmatpush1.msra.mxu0 0.0
    %72 = vmatprep.subr.mxu0 0.0
    %73 = vmatpush1.msra.mxu0 0.0
    %74 = vmatprep.subr.mxu0 0.0
    %75 = vmatpush1.msra.mxu0 0.0
    %76 = vmatprep.subr.mxu0 0.0
    %77 = vmatpush1.msra.mxu0 0.0
    %78 = vmatprep.subr.mxu0 0.0
    %79 = vmatpush1.msra.mxu0 0.0
    %80 = vmatprep.subr.mxu0 0.0
    %81 = vmatpush1.msra.mxu0 0.0
    %82 = vmatprep.subr.mxu0 0.0
    %83 = vmatpush1.msra.mxu0 0.0
    %84 = vmatprep.subr.mxu0 0.0
    %85 = vmatpush1.msra.mxu0 0.0
    %86 = vmatprep.subr.mxu0 0.0
    %87 = vmatpush1.msra.mxu0 0.0
    %88 = vmatprep.subr.mxu0 0.0
    %89 = vmatpush1.msra.mxu0 0.0
    %90 = vmatprep.subr.mxu0 0.0
    %91 = vmatpush1.msra.mxu0 0.0
    %92 = vmatprep.subr.mxu0 0.0
    %93 = vmatpush1.msra.mxu0 0.0
    %94 = vmatprep.subr.mxu0 0.0
    %95 = vmatpush1.msra.mxu0 0.0
    %96 = vmatprep.subr.mxu0 0.0
    %97 = vmatpush1.msra.mxu0 0.0
    %98 = vmatprep.subr.mxu0 0.0
    %99 = vmatpush1.msra.mxu0 0.0
    %100 = vmatprep.subr.mxu0 0.0
    %101 = vmatpush1.msra.mxu0 0.0
    %102 = vmatprep.subr.mxu0 0.0
    %103 = vmatpush1.msra.mxu0 0.0
    %104 = vmatprep.subr.mxu0 0.0
    %105 = vmatpush1.msra.mxu0 0.0
    %106 = vmatprep.subr.mxu0 0.0
    %107 = vmatpush1.msra.mxu0 0.0
    %108 = vmatprep.subr.mxu0 0.0
    %109 = vmatpush1.msra.mxu0 0.0
    %110 = vmatprep.subr.mxu0 0.0
    %111 = vmatpush1.msra.mxu0 0.0
    %112 = vmatprep.subr.mxu0 0.0
    %113 = vmatpush1.msra.mxu0 0.0
    %114 = vmatprep.subr.mxu0 0.0
    %115 = vmatpush1.msra.mxu0 0.0
    %116 = vmatprep.subr.mxu0 0.0
    %117 = vmatpush1.msra.mxu0 0.0
    %118 = vmatprep.subr.mxu0 0.0
    %119 = vmatpush1.msra.mxu0 0.0
    %120 = vmatprep.subr.mxu0 0.0
    %121 = vmatpush1.msra.mxu0 0.0
    %122 = vmatprep.subr.mxu0 0.0
    %123 = vmatpush1.msra.mxu0 0.0
    %124 = vmatprep.subr.mxu0 0.0
    %125 = vmatpush1.msra.mxu0 0.0
    %126 = vmatprep.subr.mxu0 0.0
    %127 = vmatpush1.msra.mxu0 0.0
    %128 = vmatprep.subr.mxu0 0.0
    %129 = vmatpush1.msra.mxu0 0.0
    %130 = vmatprep.subr.mxu0 0.0
    %131 = vmatpush1.msra.mxu0 0.0
    %132 = vmatprep.mubr.f32.mxu0 0.0
    %133 = vmatmul.mubr.f32.gmra.mrb[0].mxu0 %v62
    %v134 = vpop.f32.mrb[0].mxu0
    %v135 = vadd.f32 %v59, %v134
    %v136 = vpop.f32.mrb[0].mxu0
    %137 = vdwg.mxu0
    %vm138 = vcmask 261120
    %v139 = vsel %vm138, %v135, 0.0
    %140 = vadd.xlane.f32.xlu0 %v139
    %v141 = vpop.xlane.xlu0 %140
    %v142 = vrcp.pop 32.0
    %v143 = vmul.f32 %v141, %v142
    %v144 = vsub.f32 %v135, %v143
    %v145 = vmul.f32 %v144, %v144
    %v146 = vsel %vm138, %v145, 0.0
    %147 = vadd.xlane.f32.xlu0 %v146
    %v148 = vpop.xlane.xlu0 %147
    %v149 = vmul.f32 %v148, %v142
    %v150 = vadd.f32 %v149, 1e-05
    %v151 = vrsqrt.pop %v150
    %v152 = vmul.f32 %v144, %v151
    %v153 = vlaneseq
    %v154 = vshrl.u32 %v153, 7
    %v155 = vsub.s32 0, %v154
    %v156 = vrot.slane %v53, %v155
    %v157 = vmul.f32 %v152, %v156
    %v158 = vlaneseq
    %v159 = vshrl.u32 %v158, 7
    %v160 = vsub.s32 0, %v159
    %v161 = vrot.slane %v54, %v160
    %v162 = vadd.f32 %v157, %v161
    %v163 = vmul.f32 %v162, 0.5
    %v164 = vmul.f32 %v162, 0.70710677
    %v165 = verf.f32.pop %v164
    %v166 = vadd.f32 %v165, 1.0
    %v167 = vmul.f32 %v163, %v166
    %v168 = vmul.f32 %v135, 0.5
    %v169 = vmul.f32 %v135, 0.70710677
    %v170 = verf.f32.pop %v169
    %v171 = vadd.f32 %v170, 1.0
    %v172 = vmul.f32 %v168, %v171
    %v173 = vlaneseq
    %v174 = vshrl.u32 %v173, 7
    %v175 = vsub.s32 0, %v174
    %v176 = vrot.slane %v51, %v175
    %178 = vrot.lane.b32.xlu0 %v176, 32
    %v179 = vpop.permute.xlu0 %178
    %v181 = vadd.f32 %v135, %v179
    %v182 = vmul.f32 %v181, 0.5
    %v183 = vmul.f32 %v181, 0.70710677
    %v184 = verf.f32.pop %v183
    %v185 = vadd.f32 %v184, 1.0
    %v186 = vmul.f32 %v182, %v185
    %v187 = vadd.f32 %v172, %v186
    %v188 = vld [vmem:[#allocation2] sm:$0xff]
    %v189 = vld [vmem:[#allocation2 + $0x8] sm:$0xff]
    %v190 = vld [vmem:[#allocation2 + $0x10] sm:$0xff]
    %v191 = vld [vmem:[#allocation2 + $0x18] sm:$0xff]
    %v192 = vld [vmem:[#allocation5] sm:$0xff]
    %v193 = vld [vmem:[#allocation5 + $0x8] sm:$0xff]
    %v194 = vld [vmem:[#allocation5 + $0x10] sm:$0xff]
    %v195 = vld [vmem:[#allocation5 + $0x18] sm:$0xff]
    %197 = vrot.lane.b32.xlu0 %v187, 96
    %v198 = vpop.permute.xlu0 %197
    %v199 = vsel %vm138, %v198, 0
    %201 = vmatprep.subr.mxu0 0.0
    %202 = vmatpush1.msra.mxu0 %v192
    %203 = vmatprep.subr.mxu0 0.0
    %204 = vmatpush1.msra.mxu0 %v193
    %205 = vmatprep.subr.mxu0 0.0
    %206 = vmatpush1.msra.mxu0 %v194
    %207 = vmatprep.subr.mxu0 0.0
    %208 = vmatpush1.msra.mxu0 %v195
    %209 = vmatprep.subr.mxu0 0.0
    %210 = vmatpush1.msra.mxu0 0.0
    %211 = vmatprep.subr.mxu0 0.0
    %212 = vmatpush1.msra.mxu0 0.0
    %213 = vmatprep.subr.mxu0 0.0
    %214 = vmatpush1.msra.mxu0 0.0
    %215 = vmatprep.subr.mxu0 0.0
    %216 = vmatpush1.msra.mxu0 0.0
    %217 = vmatprep.subr.mxu0 0.0
    %218 = vmatpush1.msra.mxu0 0.0
    %219 = vmatprep.subr.mxu0 0.0
    %220 = vmatpush1.msra.mxu0 0.0
    %221 = vmatprep.subr.mxu0 0.0
    %222 = vmatpush1.msra.mxu0 0.0
    %223 = vmatprep.subr.mxu0 0.0
    %224 = vmatpush1.msra.mxu0 0.0
    %225 = vmatprep.subr.mxu0 0.0
    %226 = vmatpush1.msra.mxu0 0.0
    %227 = vmatprep.subr.mxu0 0.0
    %228 = vmatpush1.msra.mxu0 0.0
    %229 = vmatprep.subr.mxu0 0.0
    %230 = vmatpush1.msra.mxu0 0.0
    %231 = vmatprep.subr.mxu0 0.0
    %232 = vmatpush1.msra.mxu0 0.0
    %233 = vmatprep.subr.mxu0 0.0
    %234 = vmatpush1.msra.mxu0 0.0
    %235 = vmatprep.subr.mxu0 0.0
    %236 = vmatpush1.msra.mxu0 0.0
    %237 = vmatprep.subr.mxu0 0.0
    %238 = vmatpush1.msra.mxu0 0.0
    %239 = vmatprep.subr.mxu0 0.0
    %240 = vmatpush1.msra.mxu0 0.0
    %241 = vmatprep.subr.mxu0 0.0
    %242 = vmatpush1.msra.mxu0 0.0
    %243 = vmatprep.subr.mxu0 0.0
    %244 = vmatpush1.msra.mxu0 0.0
    %245 = vmatprep.subr.mxu0 0.0
    %246 = vmatpush1.msra.mxu0 0.0
    %247 = vmatprep.subr.mxu0 0.0
    %248 = vmatpush1.msra.mxu0 0.0
    %249 = vmatprep.subr.mxu0 0.0
    %250 = vmatpush1.msra.mxu0 0.0
    %251 = vmatprep.subr.mxu0 0.0
    %252 = vmatpush1.msra.mxu0 0.0
    %253 = vmatprep.subr.mxu0 0.0
    %254 = vmatpush1.msra.mxu0 0.0
    %255 = vmatprep.subr.mxu0 0.0
    %256 = vmatpush1.msra.mxu0 0.0
    %257 = vmatprep.subr.mxu0 0.0
    %258 = vmatpush1.msra.mxu0 0.0
    %259 = vmatprep.subr.mxu0 0.0
    %260 = vmatpush1.msra.mxu0 0.0
    %261 = vmatprep.subr.mxu0 0.0
    %262 = vmatpush1.msra.mxu0 0.0
    %263 = vmatprep.subr.mxu0 0.0
    %264 = vmatpush1.msra.mxu0 0.0
    %265 = vmatprep.mubr.f32.mxu0 0.0
    %266 = vmatmul.mubr.f32.gmra.mrb[0].mxu0 %v199
    %v267 = vpop.f32.mrb[0].mxu0
    %v268 = vadd.f32 0.0, %v267
    %v269 = vpop.f32.mrb[0].mxu0
    %270 = vdwg.mxu0
    %v272 = vsel %vm138, %v167, 0
    %274 = vmatprep.subr.mxu0 0.0
    %275 = vmatpush1.msra.mxu0 %v188
    %276 = vmatprep.subr.mxu0 0.0
    %277 = vmatpush1.msra.mxu0 %v189
    %278 = vmatprep.subr.mxu0 0.0
    %279 = vmatpush1.msra.mxu0 %v190
    %280 = vmatprep.subr.mxu0 0.0
    %281 = vmatpush1.msra.mxu0 %v191
    %282 = vmatprep.subr.mxu0 0.0
    %283 = vmatpush1.msra.mxu0 0.0
    %284 = vmatprep.subr.mxu0 0.0
    %285 = vmatpush1.msra.mxu0 0.0
    %286 = vmatprep.subr.mxu0 0.0
    %287 = vmatpush1.msra.mxu0 0.0
    %288 = vmatprep.subr.mxu0 0.0
    %289 = vmatpush1.msra.mxu0 0.0
    %290 = vmatprep.subr.mxu0 0.0
    %291 = vmatpush1.msra.mxu0 0.0
    %292 = vmatprep.subr.mxu0 0.0
    %293 = vmatpush1.msra.mxu0 0.0
    %294 = vmatprep.subr.mxu0 0.0
    %295 = vmatpush1.msra.mxu0 0.0
    %296 = vmatprep.subr.mxu0 0.0
    %297 = vmatpush1.msra.mxu0 0.0
    %298 = vmatprep.subr.mxu0 0.0
    %299 = vmatpush1.msra.mxu0 0.0
    %300 = vmatprep.subr.mxu0 0.0
    %301 = vmatpush1.msra.mxu0 0.0
    %302 = vmatprep.subr.mxu0 0.0
    %303 = vmatpush1.msra.mxu0 0.0
    %304 = vmatprep.subr.mxu0 0.0
    %305 = vmatpush1.msra.mxu0 0.0
    %306 = vmatprep.subr.mxu0 0.0
    %307 = vmatpush1.msra.mxu0 0.0
    %308 = vmatprep.subr.mxu0 0.0
    %309 = vmatpush1.msra.mxu0 0.0
    %310 = vmatprep.subr.mxu0 0.0
    %311 = vmatpush1.msra.mxu0 0.0
    %312 = vmatprep.subr.mxu0 0.0
    %313 = vmatpush1.msra.mxu0 0.0
    %314 = vmatprep.subr.mxu0 0.0
    %315 = vmatpush1.msra.mxu0 0.0
    %316 = vmatprep.subr.mxu0 0.0
    %317 = vmatpush1.msra.mxu0 0.0
    %318 = vmatprep.subr.mxu0 0.0
    %319 = vmatpush1.msra.mxu0 0.0
    %320 = vmatprep.subr.mxu0 0.0
    %321 = vmatpush1.msra.mxu0 0.0
    %322 = vmatprep.subr.mxu0 0.0
    %323 = vmatpush1.msra.mxu0 0.0
    %324 = vmatprep.subr.mxu0 0.0
    %325 = vmatpush1.msra.mxu0 0.0
    %326 = vmatprep.subr.mxu0 0.0
    %327 = vmatpush1.msra.mxu0 0.0
    %328 = vmatprep.subr.mxu0 0.0
    %329 = vmatpush1.msra.mxu0 0.0
    %330 = vmatprep.subr.mxu0 0.0
    %331 = vmatpush1.msra.mxu0 0.0
    %332 = vmatprep.subr.mxu0 0.0
    %333 = vmatpush1.msra.mxu0 0.0
    %334 = vmatprep.subr.mxu0 0.0
    %335 = vmatpush1.msra.mxu0 0.0
    %336 = vmatprep.subr.mxu0 0.0
    %337 = vmatpush1.msra.mxu0 0.0
    %338 = vmatprep.mubr.f32.mxu0 0.0
    %339 = vmatmul.mubr.f32.gmra.mrb[0].mxu0 %v272
    %v340 = vpop.f32.mrb[0].mxu0
    %v341 = vadd.f32 %v268, %v340
    %v342 = vpop.f32.mrb[0].mxu0
    %343 = vdwg.mxu0
    %v344 = vlaneseq
    %v345 = vshrl.u32 %v344, 7
    %v346 = vsub.s32 0, %v345
    %v347 = vrot.slane %v52, %v346
    %v348 = vadd.f32 %v341, %v347
    %v349 = vlaneseq
    %v350 = vand.u32 %v349, 127
    %vm351 = vcmp.eq.s32.totalorder %v350, 35
    %v352 = vxor.u32 %v348, 2147483648
    %v353 = vmul.f32 %v352, 1.442695
    %v354 = vpow.pop %v353
    %v355 = vadd.f32 %v354, 1.0
    %v356 = vrcp.pop %v355
    %v357 = vmul.f32 1.0, %v356
    %v358 = vsel %vm351, %v357, %v348
    %359 = vst [vmem:[#allocation7] sm:$0xff] %v358
    // Predicated region
    $region30: #{tpu_custom_call.1} parent=1 // pred_check
      _
    $region31: #{tpu_custom_call.1} parent=1 // pred_check_branch
      %361 = sbr.rel (0) target = $region33
    $region32: #{tpu_custom_call.1} parent=1 // pred_region
      %s363 = ssub.s32 128, 128
      %364 = vsyncadd [#allocation4], %s363
      %s366 = sshll.u32 [#allocation7], 4
      %s367 = int_to_ptr.vmem [resolvable:$true] %s366
      %369 = dma.vmem_to_hbm [thread:$0]  %s367, 128, %s5, [#allocation4]
    $region33: #{tpu_custom_call.1} parent=1 // pred_fallthru
      _
    // Predicated region
    $region34: #{tpu_custom_call.1} parent=1 // pred_check
      _
    $region35: #{tpu_custom_call.1} parent=1 // pred_check_branch
      %371 = sbr.rel (0) target = $region37
    $region36: #{tpu_custom_call.1} parent=1 // pred_region
      %372 = dma.done [#allocation4], 128
    $region37: #{tpu_custom_call.1} parent=1 // pred_fallthru
      _
    %373 = vsyncpa [#allocation3], 1
    %374 = vsyncpa [#allocation6], 1
    %375 = vsyncpa [#allocation4], 1

</llo_original>
